<compile_context>
chip_gen: v7x
topology: tpu7x:2x2x1
jax: 0.10.0
libtpu: 0.0.40
codegen_flags: <defaults>
</compile_context>

<pallas_src>
import math

import jax
import jax.numpy as jnp
from jax.experimental import pallas as pl
from jax.experimental.pallas import tpu as pltpu


def shape_adapter_kernel(x_ref, g1_ref, b1_ref, w1_ref, c1_ref,
                         w2_ref, c2_ref, g2_ref, b2_ref, o_ref):
    eps = 1e-5
    x = x_ref[...].astype(jnp.float32)

    # --- LayerNorm(input_dim) ---
    mu = jnp.mean(x, axis=-1, keepdims=True)
    xc = x - mu
    var = jnp.mean(xc * xc, axis=-1, keepdims=True)
    h = xc * jax.lax.rsqrt(var + eps) * g1_ref[...] + b1_ref[...]

    # --- Dropout(p=0.1): identity in eval/inference mode ---
    # TODO(synk): training-mode dropout (pltpu.prng_random_bits mask) not implemented.

    # --- Linear(input_dim, output_dim) --- (full row tile -> large-M MXU op)
    h = jnp.dot(h, w1_ref[...], preferred_element_type=jnp.float32) + c1_ref[...]

    # --- GELU (exact erf form, matching torch.nn.GELU default) ---
    h = 0.5 * h * (1.0 + jax.lax.erf(h * (1.0 / math.sqrt(2.0))))

    # --- Linear(output_dim, output_dim) ---
    h = jnp.dot(h, w2_ref[...], preferred_element_type=jnp.float32) + c2_ref[...]

    # --- Dropout(p=0.1): identity in eval/inference mode ---

    # --- LayerNorm(output_dim) ---
    mu2 = jnp.mean(h, axis=-1, keepdims=True)
    hc = h - mu2
    var2 = jnp.mean(hc * hc, axis=-1, keepdims=True)
    out = hc * jax.lax.rsqrt(var2 + eps) * g2_ref[...] + b2_ref[...]

    o_ref[...] = out.astype(o_ref.dtype)


def _pick_block_rows(requested, rows, d_in, d_out, vmem_budget=8 << 20):
    """Largest row tile <= requested that (a) covers rows when small and
    (b) keeps the double-buffered VMEM footprint under a conservative budget."""
    # Bytes resident independent of the row tile (weights + bias/LN vectors).
    weight_bytes = 4 * (d_in * d_out + d_out * d_out + 2 * d_in + 4 * d_out)
    # Per-row bytes: input tile + f32 working copy + hidden/out intermediates + out tile.
    per_row = 4 * (2 * d_in + 3 * d_out)
    avail = max(vmem_budget - weight_bytes, 0)
    vmem_cap = max(avail // (2 * per_row), 8)          # x2 for double buffering
    blk = min(requested, vmem_cap, ((rows + 7) // 8) * 8)
    blk = max((blk // 8) * 8, 8)                        # multiple of 8 sublanes
    return blk


def shape_adapter(x, params, *, block_rows=1024):
    """x: (..., input_dim) -> (..., output_dim). Fused Pallas kernel."""
    g1, b1, w1, c1, w2, c2, g2, b2 = params
    d_in = x.shape[-1]
    d_out = w1.shape[1]
    lead = x.shape[:-1]
    rows = 1
    for d in lead:
        rows *= d
    x2 = x.reshape(rows, d_in)

    eff_block = _pick_block_rows(block_rows, rows, d_in, d_out)

    # Pad rows up to a multiple of the tile; zero rows are harmless (row-independent
    # pipeline, LN of a zero row stays finite thanks to eps); slice after.
    padded_rows = pl.cdiv(rows, eff_block) * eff_block
    if padded_rows != rows:
        x2 = jnp.pad(x2, ((0, padded_rows - rows), (0, 0)))

    grid = (padded_rows // eff_block,)

    # Biases / LN params presented as (1, D) so they broadcast over rows in-kernel.
    g1r, b1r = g1.reshape(1, d_in), b1.reshape(1, d_in)
    c1r = c1.reshape(1, d_out)
    c2r = c2.reshape(1, d_out)
    g2r, b2r = g2.reshape(1, d_out), b2.reshape(1, d_out)

    rowspec_in = pl.BlockSpec((eff_block, d_in), lambda i: (i, 0))
    rowspec_out = pl.BlockSpec((eff_block, d_out), lambda i: (i, 0))
    full = lambda shp: pl.BlockSpec(shp, lambda i: (0, 0))

    out = pl.pallas_call(
        shape_adapter_kernel,
        out_shape=jax.ShapeDtypeStruct((padded_rows, d_out), x.dtype),
        grid_spec=pltpu.PrefetchScalarGridSpec(
            num_scalar_prefetch=0,
            grid=grid,
            in_specs=[
                rowspec_in,                 # x block
                full((1, d_in)),            # ln1 gamma
                full((1, d_in)),            # ln1 beta
                full((d_in, d_out)),        # W1
                full((1, d_out)),           # b1
                full((d_out, d_out)),       # W2
                full((1, d_out)),           # b2
                full((1, d_out)),           # ln2 gamma
                full((1, d_out)),           # ln2 beta
            ],
            out_specs=rowspec_out,
        ),
        compiler_params=pltpu.CompilerParams(
            dimension_semantics=("parallel",)),
    )(x2, g1r, b1r, w1, c1r, w2, c2r, g2r, b2r)

    if padded_rows != rows:
        out = out[:rows]
    return out.reshape(*lead, d_out)


def shape_adapter_ref(x, params):
    """Pure-JAX reference (eval-mode forward of the torch module)."""
    g1, b1, w1, c1, w2, c2, g2, b2 = params
    eps = 1e-5

    def ln(v, g, b):
        mu = jnp.mean(v, axis=-1, keepdims=True)
        var = jnp.mean((v - mu) ** 2, axis=-1, keepdims=True)
        return (v - mu) * jax.lax.rsqrt(var + eps) * g + b

    h = ln(x.astype(jnp.float32), g1, b1)
    h = h @ w1 + c1
    h = 0.5 * h * (1.0 + jax.lax.erf(h / math.sqrt(2.0)))
    h = h @ w2 + c2
    return ln(h, g2, b2).astype(x.dtype)


if __name__ == "__main__":
    batch, seq = 2, 8
    input_dim, output_dim = 32, 64

    key = jax.random.PRNGKey(0)
    kx, kw1, kb1, kw2, kb2 = jax.random.split(key, 5)

    x = jax.random.normal(kx, (batch, seq, input_dim), dtype=jnp.float32)

    # Deterministic synthetic parameters (shapes match the torch module).
    g1 = jnp.ones((input_dim,), jnp.float32)           # LayerNorm(input_dim).weight
    b1 = jnp.zeros((input_dim,), jnp.float32)          # LayerNorm(input_dim).bias
    w1 = jax.random.normal(kw1, (input_dim, output_dim), jnp.float32) * 0.05
    c1 = jax.random.normal(kb1, (output_dim,), jnp.float32) * 0.02
    w2 = jax.random.normal(kw2, (output_dim, output_dim), jnp.float32) * 0.05
    c2 = jax.random.normal(kb2, (output_dim,), jnp.float32) * 0.02
    g2 = jnp.ones((output_dim,), jnp.float32)          # LayerNorm(output_dim).weight
    b2 = jnp.zeros((output_dim,), jnp.float32)         # LayerNorm(output_dim).bias

    params = (g1, b1, w1, c1, w2, c2, g2, b2)

    # Small-shape correctness run (rows=16 -> single 16-row tile after clamping).
    y = shape_adapter(x, params)
    y = jax.block_until_ready(y)

    y_ref = shape_adapter_ref(x, params)
    assert y.shape == (batch, seq, output_dim)
    assert jnp.allclose(y, y_ref, atol=1e-4, rtol=1e-4), "mismatch vs reference"

    # Exercise the padded / multi-tile path too (non-divisible row count).
    x_big = jax.random.normal(kx, (3, 700, input_dim), dtype=jnp.float32)
    y_big = jax.block_until_ready(shape_adapter(x_big, params, block_rows=1024))
    y_big_ref = shape_adapter_ref(x_big, params)
    assert jnp.allclose(y_big, y_big_ref, atol=1e-4, rtol=1e-4), "mismatch (padded path)"

    print("KERNEL_OK")
</pallas_src>

<mosaic_0001>
module attributes {stable_mosaic.version = 11 : i64} {
  func.func @shape_adapter_kernel(%arg0: i32, %arg1: memref<16x32xf32, #tpu.memory_space<vmem>>, %arg2: memref<1x32xf32, #tpu.memory_space<vmem>>, %arg3: memref<1x32xf32, #tpu.memory_space<vmem>>, %arg4: memref<32x64xf32, #tpu.memory_space<vmem>>, %arg5: memref<1x64xf32, #tpu.memory_space<vmem>>, %arg6: memref<64x64xf32, #tpu.memory_space<vmem>>, %arg7: memref<1x64xf32, #tpu.memory_space<vmem>>, %arg8: memref<1x64xf32, #tpu.memory_space<vmem>>, %arg9: memref<1x64xf32, #tpu.memory_space<vmem>>, %arg10: memref<16x64xf32, #tpu.memory_space<vmem>>) attributes {dimension_semantics = [#tpu.dimension_semantics<parallel>], iteration_bounds = array<i64: 1>, scalar_prefetch = 0 : i64, scratch_operands = 0 : i64, tpu.core_type = #tpu.core_type<tc>, window_params = [{transform_indices = @transform_0, window_bounds = array<i64: 16, 32>}, {pipeline_mode = #tpu.pipeline_mode<synchronous>, transform_indices = @transform_1, window_bounds = array<i64: 1, 32>}, {pipeline_mode = #tpu.pipeline_mode<synchronous>, transform_indices = @transform_2, window_bounds = array<i64: 1, 32>}, {pipeline_mode = #tpu.pipeline_mode<synchronous>, transform_indices = @transform_3, window_bounds = array<i64: 32, 64>}, {pipeline_mode = #tpu.pipeline_mode<synchronous>, transform_indices = @transform_4, window_bounds = array<i64: 1, 64>}, {pipeline_mode = #tpu.pipeline_mode<synchronous>, transform_indices = @transform_5, window_bounds = array<i64: 64, 64>}, {pipeline_mode = #tpu.pipeline_mode<synchronous>, transform_indices = @transform_6, window_bounds = array<i64: 1, 64>}, {pipeline_mode = #tpu.pipeline_mode<synchronous>, transform_indices = @transform_7, window_bounds = array<i64: 1, 64>}, {pipeline_mode = #tpu.pipeline_mode<synchronous>, transform_indices = @transform_8, window_bounds = array<i64: 1, 64>}, {transform_indices = @transform_9, window_bounds = array<i64: 16, 64>}]} {
    %c0 = arith.constant 0 : index
    %c0_0 = arith.constant 0 : index
    %0 = vector.load %arg1[%c0, %c0_0] : memref<16x32xf32, #tpu.memory_space<vmem>>, vector<16x32xf32>
    %cst = arith.constant dense<0.000000e+00> : vector<16xf32>
    %1 = vector.multi_reduction <add>, %0, %cst [1] : vector<16x32xf32> to vector<16xf32>
    %2 = vector.shape_cast %1 : vector<16xf32> to vector<16x1xf32>
    %cst_1 = arith.constant 3.200000e+01 : f32
    %3 = vector.broadcast %cst_1 : f32 to vector<16x1xf32>
    %4 = arith.divf %2, %3 : vector<16x1xf32>
    %5 = vector.broadcast %4 : vector<16x1xf32> to vector<16x32xf32>
    %6 = arith.subf %0, %5 : vector<16x32xf32>
    %7 = arith.mulf %6, %6 : vector<16x32xf32>
    %cst_2 = arith.constant dense<0.000000e+00> : vector<16xf32>
    %8 = vector.multi_reduction <add>, %7, %cst_2 [1] : vector<16x32xf32> to vector<16xf32>
    %9 = vector.shape_cast %8 : vector<16xf32> to vector<16x1xf32>
    %cst_3 = arith.constant 3.200000e+01 : f32
    %10 = vector.broadcast %cst_3 : f32 to vector<16x1xf32>
    %11 = arith.divf %9, %10 : vector<16x1xf32>
    %cst_4 = arith.constant 9.99999974E-6 : f32
    %12 = vector.broadcast %cst_4 : f32 to vector<16x1xf32>
    %13 = arith.addf %11, %12 : vector<16x1xf32>
    %14 = math.rsqrt %13 : vector<16x1xf32>
    %15 = vector.broadcast %14 : vector<16x1xf32> to vector<16x32xf32>
    %16 = arith.mulf %6, %15 : vector<16x32xf32>
    %c0_5 = arith.constant 0 : index
    %c0_6 = arith.constant 0 : index
    %17 = vector.load %arg2[%c0_5, %c0_6] : memref<1x32xf32, #tpu.memory_space<vmem>>, vector<1x32xf32>
    %18 = vector.broadcast %17 : vector<1x32xf32> to vector<16x32xf32>
    %19 = arith.mulf %16, %18 : vector<16x32xf32>
    %c0_7 = arith.constant 0 : index
    %c0_8 = arith.constant 0 : index
    %20 = vector.load %arg3[%c0_7, %c0_8] : memref<1x32xf32, #tpu.memory_space<vmem>>, vector<1x32xf32>
    %21 = vector.broadcast %20 : vector<1x32xf32> to vector<16x32xf32>
    %22 = arith.addf %19, %21 : vector<16x32xf32>
    %c0_9 = arith.constant 0 : index
    %c0_10 = arith.constant 0 : index
    %23 = vector.load %arg4[%c0_9, %c0_10] : memref<32x64xf32, #tpu.memory_space<vmem>>, vector<32x64xf32>
    %cst_11 = arith.constant dense<0.000000e+00> : vector<16x64xf32>
    %24 = tpu.matmul %22, %23, %cst_11 {dimension_numbers = #tpu.dot_dimension_numbers<[1], [0], [0], [1], [0, 0, 1, 1], [], []>} : vector<16x32xf32>, vector<32x64xf32>, vector<16x64xf32> -> vector<16x64xf32>
    %c0_12 = arith.constant 0 : index
    %c0_13 = arith.constant 0 : index
    %25 = vector.load %arg5[%c0_12, %c0_13] : memref<1x64xf32, #tpu.memory_space<vmem>>, vector<1x64xf32>
    %26 = vector.broadcast %25 : vector<1x64xf32> to vector<16x64xf32>
    %27 = arith.addf %24, %26 : vector<16x64xf32>
    %cst_14 = arith.constant 5.000000e-01 : f32
    %28 = vector.broadcast %cst_14 : f32 to vector<16x64xf32>
    %29 = arith.mulf %28, %27 : vector<16x64xf32>
    %cst_15 = arith.constant 0.707106769 : f32
    %30 = vector.broadcast %cst_15 : f32 to vector<16x64xf32>
    %31 = arith.mulf %27, %30 : vector<16x64xf32>
    %32 = math.erf %31 : vector<16x64xf32>
    %cst_16 = arith.constant 1.000000e+00 : f32
    %33 = vector.broadcast %cst_16 : f32 to vector<16x64xf32>
    %34 = arith.addf %33, %32 : vector<16x64xf32>
    %35 = arith.mulf %29, %34 : vector<16x64xf32>
    %c0_17 = arith.constant 0 : index
    %c0_18 = arith.constant 0 : index
    %36 = vector.load %arg6[%c0_17, %c0_18] : memref<64x64xf32, #tpu.memory_space<vmem>>, vector<64x64xf32>
    %cst_19 = arith.constant dense<0.000000e+00> : vector<16x64xf32>
    %37 = tpu.matmul %35, %36, %cst_19 {dimension_numbers = #tpu.dot_dimension_numbers<[1], [0], [0], [1], [0, 0, 1, 1], [], []>} : vector<16x64xf32>, vector<64x64xf32>, vector<16x64xf32> -> vector<16x64xf32>
    %c0_20 = arith.constant 0 : index
    %c0_21 = arith.constant 0 : index
    %38 = vector.load %arg7[%c0_20, %c0_21] : memref<1x64xf32, #tpu.memory_space<vmem>>, vector<1x64xf32>
    %39 = vector.broadcast %38 : vector<1x64xf32> to vector<16x64xf32>
    %40 = arith.addf %37, %39 : vector<16x64xf32>
    %cst_22 = arith.constant dense<0.000000e+00> : vector<16xf32>
    %41 = vector.multi_reduction <add>, %40, %cst_22 [1] : vector<16x64xf32> to vector<16xf32>
    %42 = vector.shape_cast %41 : vector<16xf32> to vector<16x1xf32>
    %cst_23 = arith.constant 6.400000e+01 : f32
    %43 = vector.broadcast %cst_23 : f32 to vector<16x1xf32>
    %44 = arith.divf %42, %43 : vector<16x1xf32>
    %45 = vector.broadcast %44 : vector<16x1xf32> to vector<16x64xf32>
    %46 = arith.subf %40, %45 : vector<16x64xf32>
    %47 = arith.mulf %46, %46 : vector<16x64xf32>
    %cst_24 = arith.constant dense<0.000000e+00> : vector<16xf32>
    %48 = vector.multi_reduction <add>, %47, %cst_24 [1] : vector<16x64xf32> to vector<16xf32>
    %49 = vector.shape_cast %48 : vector<16xf32> to vector<16x1xf32>
    %cst_25 = arith.constant 6.400000e+01 : f32
    %50 = vector.broadcast %cst_25 : f32 to vector<16x1xf32>
    %51 = arith.divf %49, %50 : vector<16x1xf32>
    %cst_26 = arith.constant 9.99999974E-6 : f32
    %52 = vector.broadcast %cst_26 : f32 to vector<16x1xf32>
    %53 = arith.addf %51, %52 : vector<16x1xf32>
    %54 = math.rsqrt %53 : vector<16x1xf32>
    %55 = vector.broadcast %54 : vector<16x1xf32> to vector<16x64xf32>
    %56 = arith.mulf %46, %55 : vector<16x64xf32>
    %c0_27 = arith.constant 0 : index
    %c0_28 = arith.constant 0 : index
    %57 = vector.load %arg8[%c0_27, %c0_28] : memref<1x64xf32, #tpu.memory_space<vmem>>, vector<1x64xf32>
    %58 = vector.broadcast %57 : vector<1x64xf32> to vector<16x64xf32>
    %59 = arith.mulf %56, %58 : vector<16x64xf32>
    %c0_29 = arith.constant 0 : index
    %c0_30 = arith.constant 0 : index
    %60 = vector.load %arg9[%c0_29, %c0_30] : memref<1x64xf32, #tpu.memory_space<vmem>>, vector<1x64xf32>
    %61 = vector.broadcast %60 : vector<1x64xf32> to vector<16x64xf32>
    %62 = arith.addf %59, %61 : vector<16x64xf32>
    %c0_31 = arith.constant 0 : index
    %c0_32 = arith.constant 0 : index
    %63 = vector.load %arg10[%c0_31, %c0_32] : memref<16x64xf32, #tpu.memory_space<vmem>>, vector<16x64xf32>
    tpu.vector_store %arg10[%c0_31, %c0_32], %62 {strides = array<i32>} : memref<16x64xf32, #tpu.memory_space<vmem>>, vector<16x64xf32>,
    return
  }
  func.func @transform_0(%arg0: i32) -> (i32, i32) {
    %c0_i32 = arith.constant 0 : i32
    %c0_i32_0 = arith.constant 0 : i32
    return %arg0, %c0_i32 : i32, i32
  }
  func.func @transform_1(%arg0: i32) -> (i32, i32) {
    %c0_i32 = arith.constant 0 : i32
    %c0_i32_0 = arith.constant 0 : i32
    %c0_i32_1 = arith.constant 0 : i32
    return %c0_i32, %c0_i32_0 : i32, i32
  }
  func.func @transform_2(%arg0: i32) -> (i32, i32) {
    %c0_i32 = arith.constant 0 : i32
    %c0_i32_0 = arith.constant 0 : i32
    %c0_i32_1 = arith.constant 0 : i32
    return %c0_i32, %c0_i32_0 : i32, i32
  }
  func.func @transform_3(%arg0: i32) -> (i32, i32) {
    %c0_i32 = arith.constant 0 : i32
    %c0_i32_0 = arith.constant 0 : i32
    %c0_i32_1 = arith.constant 0 : i32
    return %c0_i32, %c0_i32_0 : i32, i32
  }
  func.func @transform_4(%arg0: i32) -> (i32, i32) {
    %c0_i32 = arith.constant 0 : i32
    %c0_i32_0 = arith.constant 0 : i32
    %c0_i32_1 = arith.constant 0 : i32
    return %c0_i32, %c0_i32_0 : i32, i32
  }
  func.func @transform_5(%arg0: i32) -> (i32, i32) {
    %c0_i32 = arith.constant 0 : i32
    %c0_i32_0 = arith.constant 0 : i32
    %c0_i32_1 = arith.constant 0 : i32
    return %c0_i32, %c0_i32_0 : i32, i32
  }
  func.func @transform_6(%arg0: i32) -> (i32, i32) {
    %c0_i32 = arith.constant 0 : i32
    %c0_i32_0 = arith.constant 0 : i32
    %c0_i32_1 = arith.constant 0 : i32
    return %c0_i32, %c0_i32_0 : i32, i32
  }
  func.func @transform_7(%arg0: i32) -> (i32, i32) {
    %c0_i32 = arith.constant 0 : i32
    %c0_i32_0 = arith.constant 0 : i32
    %c0_i32_1 = arith.constant 0 : i32
    return %c0_i32, %c0_i32_0 : i32, i32
  }
  func.func @transform_8(%arg0: i32) -> (i32, i32) {
    %c0_i32 = arith.constant 0 : i32
    %c0_i32_0 = arith.constant 0 : i32
    %c0_i32_1 = arith.constant 0 : i32
    return %c0_i32, %c0_i32_0 : i32, i32
  }
  func.func @transform_9(%arg0: i32) -> (i32, i32) {
    %c0_i32 = arith.constant 0 : i32
    %c0_i32_0 = arith.constant 0 : i32
    return %arg0, %c0_i32 : i32, i32
  }
}

</mosaic_0001>

<llo_original>
// kernel: tpu_custom_call.1
$region0: #{tpu_custom_call.1}
  #allocation0 [shape = 'u32[]', space=smem, size = 0x4, offset = 0x4, fixed_abs, tag = 'smem constant byte address 0x4 - core index']
  #allocation1 [shape = 'u32[144,128]{1,0:T(1,128)}', space=vmem, size = 0x12000, scoped, tag = 'internal scratch']
  %s0 = inlined_call_operand.hbm [shape: f32[16,32], index: 0, kind: input, shape index: {}]
  %s1 = inlined_call_operand.vmem [shape: f32[1,32], index: 1, kind: input, shape index: {}]
  %s2 = inlined_call_operand.vmem [shape: f32[1,32], index: 2, kind: input, shape index: {}]
  %s3 = inlined_call_operand.hbm [shape: f32[32,64], index: 3, kind: input, shape index: {}]
  %s4 = inlined_call_operand.vmem [shape: f32[1,64], index: 4, kind: input, shape index: {}]
  %s5 = inlined_call_operand.hbm [shape: f32[64,64], index: 5, kind: input, shape index: {}]
  %s6 = inlined_call_operand.vmem [shape: f32[1,64], index: 6, kind: input, shape index: {}]
  %s7 = inlined_call_operand.vmem [shape: f32[1,64], index: 7, kind: input, shape index: {}]
  %s8 = inlined_call_operand.vmem [shape: f32[1,64], index: 8, kind: input, shape index: {}]
  %s9 = inlined_call_operand.hbm [shape: f32[16,64], index: 9, kind: output, shape index: {}]
  %s10 = sld [smem:[#allocation0]]
  $region58: #{tpu_custom_call.1} parent=0
    _
  %s12 = ssub.s32 1, %s10
  %s13 = scalar_select 0, %s12, %s10
  $region1: #{tpu_custom_call.1} parent=0
    #allocation2 [shape = 'u8[8192]{0}', space=vmem, size = 0x2000, scoped, tag = 'input window, operand 0, single buffered']
    #allocation3 [shape = 's32[1]{0}', space=sflag, size = 0x4, scoped, tag = 'scoped memory for tpu_custom_call.1']
    #allocation4 [shape = 's32[1]{0}', space=sflag, size = 0x4, scoped, tag = 'scoped memory for tpu_custom_call.1']
    #allocation5 [shape = 'u8[16384]{0}', space=vmem, size = 0x4000, scoped, tag = 'input window, operand 3, single buffered']
    #allocation6 [shape = 's32[1]{0}', space=sflag, size = 0x4, scoped, tag = 'scoped memory for tpu_custom_call.1']
    #allocation7 [shape = 'u8[32768]{0}', space=vmem, size = 0x8000, scoped, tag = 'input window, operand 5, single buffered']
    #allocation8 [shape = 'u8[8192]{0}', space=vmem, size = 0x2000, scoped, tag = 'output window, operand 0, single buffered']
    %14 = vsyncpa [#allocation3], 0
    %15 = vsyncpa [#allocation6], 0
    %16 = vsyncpa [#allocation4], 0
    // Predicated region
    $region2: #{tpu_custom_call.1} parent=1 // pred_check
      _
    $region3: #{tpu_custom_call.1} parent=1 // pred_check_branch
      %18 = sbr.rel (0) target = $region5
    $region4: #{tpu_custom_call.1} parent=1 // pred_region
      %s20 = ssub.s32 256, 256
      %21 = vsyncadd [#allocation3], %s20
      %s22 = sshll.u32 [#allocation2], 4
      %s23 = int_to_ptr.vmem [resolvable:$true] %s22
      %28 = dma.hbm_to_vmem [thread:$0]  %s0, 256, %s23, [#allocation3], 128, 128, 8
    $region5: #{tpu_custom_call.1} parent=1 // pred_fallthru
      _
    // Predicated region
    $region6: #{tpu_custom_call.1} parent=1 // pred_check
      _
    $region7: #{tpu_custom_call.1} parent=1 // pred_check_branch
      %30 = sbr.rel (0) target = $region9
    $region8: #{tpu_custom_call.1} parent=1 // pred_region
      _
    $region9: #{tpu_custom_call.1} parent=1 // pred_fallthru
      _
    // Predicated region
    $region10: #{tpu_custom_call.1} parent=1 // pred_check
      _
    $region11: #{tpu_custom_call.1} parent=1 // pred_check_branch
      %32 = sbr.rel (0) target = $region13
    $region12: #{tpu_custom_call.1} parent=1 // pred_region
      _
    $region13: #{tpu_custom_call.1} parent=1 // pred_fallthru
      _
    // Predicated region
    $region14: #{tpu_custom_call.1} parent=1 // pred_check
      _
    $region15: #{tpu_custom_call.1} parent=1 // pred_check_branch
      %34 = sbr.rel (0) target = $region17
    $region16: #{tpu_custom_call.1} parent=1 // pred_region
      %s36 = ssub.s32 512, 512
      %37 = vsyncadd [#allocation6], %s36
      %s38 = sshll.u32 [#allocation5], 4
      %s39 = int_to_ptr.vmem [resolvable:$true] %s38
      %44 = dma.hbm_to_vmem [thread:$0]  %s3, 512, %s39, [#allocation6], 128, 128, 8
    $region17: #{tpu_custom_call.1} parent=1 // pred_fallthru
      _
    // Predicated region
    $region18: #{tpu_custom_call.1} parent=1 // pred_check
      _
    $region19: #{tpu_custom_call.1} parent=1 // pred_check_branch
      %46 = sbr.rel (0) target = $region21
    $region20: #{tpu_custom_call.1} parent=1 // pred_region
      _
    $region21: #{tpu_custom_call.1} parent=1 // pred_fallthru
      _
    // Predicated region
    $region22: #{tpu_custom_call.1} parent=1 // pred_check
      _
    $region23: #{tpu_custom_call.1} parent=1 // pred_check_branch
      %48 = sbr.rel (0) target = $region25
    $region24: #{tpu_custom_call.1} parent=1 // pred_region
      %s50 = ssub.s32 1024, 1024
      %51 = vsyncadd [#allocation6], %s50
      %s52 = sshll.u32 [#allocation7], 4
      %s53 = int_to_ptr.vmem [resolvable:$true] %s52
      %58 = dma.hbm_to_vmem [thread:$0]  %s5, 1024, %s53, [#allocation6], 128, 128, 8
    $region25: #{tpu_custom_call.1} parent=1 // pred_fallthru
      _
    // Predicated region
    $region26: #{tpu_custom_call.1} parent=1 // pred_check
      _
    $region27: #{tpu_custom_call.1} parent=1 // pred_check_branch
      %60 = sbr.rel (0) target = $region29
    $region28: #{tpu_custom_call.1} parent=1 // pred_region
      _
    $region29: #{tpu_custom_call.1} parent=1 // pred_fallthru
      _
    // Predicated region
    $region30: #{tpu_custom_call.1} parent=1 // pred_check
      _
    $region31: #{tpu_custom_call.1} parent=1 // pred_check_branch
      %62 = sbr.rel (0) target = $region33
    $region32: #{tpu_custom_call.1} parent=1 // pred_region
      _
    $region33: #{tpu_custom_call.1} parent=1 // pred_fallthru
      _
    // Predicated region
    $region34: #{tpu_custom_call.1} parent=1 // pred_check
      _
    $region35: #{tpu_custom_call.1} parent=1 // pred_check_branch
      %64 = sbr.rel (0) target = $region37
    $region36: #{tpu_custom_call.1} parent=1 // pred_region
      _
    $region37: #{tpu_custom_call.1} parent=1 // pred_fallthru
      _
    // Predicated region
    $region38: #{tpu_custom_call.1} parent=1 // pred_check
      _
    $region39: #{tpu_custom_call.1} parent=1 // pred_check_branch
      %66 = sbr.rel (0) target = $region41
    $region40: #{tpu_custom_call.1} parent=1 // pred_region
      %67 = dma.done [#allocation3], 256
    $region41: #{tpu_custom_call.1} parent=1 // pred_fallthru
      _
    // Predicated region
    $region42: #{tpu_custom_call.1} parent=1 // pred_check
      _
    $region43: #{tpu_custom_call.1} parent=1 // pred_check_branch
      %69 = sbr.rel (0) target = $region45
    $region44: #{tpu_custom_call.1} parent=1 // pred_region
      %70 = dma.done [#allocation6], 512
    $region45: #{tpu_custom_call.1} parent=1 // pred_fallthru
      _
    // Predicated region
    $region46: #{tpu_custom_call.1} parent=1 // pred_check
      _
    $region47: #{tpu_custom_call.1} parent=1 // pred_check_branch
      %72 = sbr.rel (0) target = $region49
    $region48: #{tpu_custom_call.1} parent=1 // pred_region
      %73 = dma.done [#allocation6], 1024
    $region49: #{tpu_custom_call.1} parent=1 // pred_fallthru
      _
    %v74 = vld [vmem:[#allocation2] sm:$0xff]
    %v75 = vld [vmem:[#allocation2 + $0x8] sm:$0xff]
    %vm76 = vcmask 261120
    %v77 = vsel %vm76, %v74, 0.0
    %78 = vadd.xlane.f32.xlu0 %v77
    %v79 = vpop.xlane.xlu0 %78
    %v80 = vsel %vm76, %v75, 0.0
    %81 = vadd.xlane.f32.xlu0 %v80
    %v82 = vpop.xlane.xlu0 %81
    %v83 = vrcp.pop 32.0
    %v84 = vmul.f32 %v79, %v83
    %v85 = vmul.f32 %v82, %v83
    %v86 = vsub.f32 %v74, %v84
    %v87 = vsub.f32 %v75, %v85
    %v88 = vmul.f32 %v86, %v86
    %v89 = vmul.f32 %v87, %v87
    %v90 = vsel %vm76, %v88, 0.0
    %91 = vadd.xlane.f32.xlu0 %v90
    %v92 = vpop.xlane.xlu0 %91
    %v93 = vsel %vm76, %v89, 0.0
    %94 = vadd.xlane.f32.xlu0 %v93
    %v95 = vpop.xlane.xlu0 %94
    %v96 = vmul.f32 %v92, %v83
    %v97 = vmul.f32 %v95, %v83
    %v98 = vadd.f32 %v96, 1e-05
    %v99 = vadd.f32 %v97, 1e-05
    %v100 = vrsqrt.pop %v98
    %v101 = vrsqrt.pop %v99
    %v102 = vmul.f32 %v86, %v100
    %v103 = vmul.f32 %v87, %v101
    %v104 = vld [vmem:[%s1] sm:$0x1]
    %v106 = vlaneseq
    %v107 = vshrl.u32 %v106, 7
    %v108 = vsub.s32 0, %v107
    %v109 = vrot.slane %v104, %v108
    %v111 = vmul.f32 %v102, %v109
    %v112 = vmul.f32 %v103, %v109
    %v113 = vld [vmem:[%s2] sm:$0x1]
    %v115 = vlaneseq
    %v116 = vshrl.u32 %v115, 7
    %v117 = vsub.s32 0, %v116
    %v118 = vrot.slane %v113, %v117
    %v120 = vadd.f32 %v111, %v118
    %v121 = vadd.f32 %v112, %v118
    %v122 = vld [vmem:[#allocation5] sm:$0xff]
    %v123 = vld [vmem:[#allocation5 + $0x8] sm:$0xff]
    %v124 = vld [vmem:[#allocation5 + $0x10] sm:$0xff]
    %v125 = vld [vmem:[#allocation5 + $0x18] sm:$0xff]
    %v126 = vld [vmem:[%s4] sm:$0x1]
    %v128 = vlaneseq
    %v129 = vshrl.u32 %v128, 7
    %v130 = vsub.s32 0, %v129
    %v131 = vrot.slane %v126, %v130
    %v134 = vsel %vm76, %v120, 0
    %v137 = vsel %vm76, %v121, 0
    %139 = vmatprep.subr.mxu0 0.0
    %140 = vmatpush1.msra.mxu0 %v122
    %141 = vmatprep.subr.mxu0 0.0
    %142 = vmatpush1.msra.mxu0 %v123
    %143 = vmatprep.subr.mxu0 0.0
    %144 = vmatpush1.msra.mxu0 %v124
    %145 = vmatprep.subr.mxu0 0.0
    %146 = vmatpush1.msra.mxu0 %v125
    %147 = vmatprep.subr.mxu0 0.0
    %148 = vmatpush1.msra.mxu0 0.0
    %149 = vmatprep.subr.mxu0 0.0
    %150 = vmatpush1.msra.mxu0 0.0
    %151 = vmatprep.subr.mxu0 0.0
    %152 = vmatpush1.msra.mxu0 0.0
    %153 = vmatprep.subr.mxu0 0.0
    %154 = vmatpush1.msra.mxu0 0.0
    %155 = vmatprep.subr.mxu0 0.0
    %156 = vmatpush1.msra.mxu0 0.0
    %157 = vmatprep.subr.mxu0 0.0
    %158 = vmatpush1.msra.mxu0 0.0
    %159 = vmatprep.subr.mxu0 0.0
    %160 = vmatpush1.msra.mxu0 0.0
    %161 = vmatprep.subr.mxu0 0.0
    %162 = vmatpush1.msra.mxu0 0.0
    %163 = vmatprep.subr.mxu0 0.0
    %164 = vmatpush1.msra.mxu0 0.0
    %165 = vmatprep.subr.mxu0 0.0
    %166 = vmatpush1.msra.mxu0 0.0
    %167 = vmatprep.subr.mxu0 0.0
    %168 = vmatpush1.msra.mxu0 0.0
    %169 = vmatprep.subr.mxu0 0.0
    %170 = vmatpush1.msra.mxu0 0.0
    %171 = vmatprep.subr.mxu0 0.0
    %172 = vmatpush1.msra.mxu0 0.0
    %173 = vmatprep.subr.mxu0 0.0
    %174 = vmatpush1.msra.mxu0 0.0
    %175 = vmatprep.subr.mxu0 0.0
    %176 = vmatpush1.msra.mxu0 0.0
    %177 = vmatprep.subr.mxu0 0.0
    %178 = vmatpush1.msra.mxu0 0.0
    %179 = vmatprep.subr.mxu0 0.0
    %180 = vmatpush1.msra.mxu0 0.0
    %181 = vmatprep.subr.mxu0 0.0
    %182 = vmatpush1.msra.mxu0 0.0
    %183 = vmatprep.subr.mxu0 0.0
    %184 = vmatpush1.msra.mxu0 0.0
    %185 = vmatprep.subr.mxu0 0.0
    %186 = vmatpush1.msra.mxu0 0.0
    %187 = vmatprep.subr.mxu0 0.0
    %188 = vmatpush1.msra.mxu0 0.0
    %189 = vmatprep.subr.mxu0 0.0
    %190 = vmatpush1.msra.mxu0 0.0
    %191 = vmatprep.subr.mxu0 0.0
    %192 = vmatpush1.msra.mxu0 0.0
    %193 = vmatprep.subr.mxu0 0.0
    %194 = vmatpush1.msra.mxu0 0.0
    %195 = vmatprep.subr.mxu0 0.0
    %196 = vmatpush1.msra.mxu0 0.0
    %197 = vmatprep.subr.mxu0 0.0
    %198 = vmatpush1.msra.mxu0 0.0
    %199 = vmatprep.subr.mxu0 0.0
    %200 = vmatpush1.msra.mxu0 0.0
    %201 = vmatprep.subr.mxu0 0.0
    %202 = vmatpush1.msra.mxu0 0.0
    %203 = vmatprep.mubr.f32.mxu0 0.0
    %204 = vmatmul.mubr.f32.gmra.mrb[0].mxu0 %v134
    %v205 = vpop.f32.mrb[0].mxu0
    %v206 = vadd.f32 %v131, %v205
    %v207 = vpop.f32.mrb[0].mxu0
    %208 = vmatprep.mubr.f32.mxu0 0.0
    %209 = vmatmul.mubr.f32.gmra.mrb[0].mxu0 %v137
    %v210 = vpop.f32.mrb[0].mxu0
    %v211 = vadd.f32 %v131, %v210
    %v212 = vpop.f32.mrb[0].mxu0
    %213 = vdwg.mxu0
    %v214 = vmul.f32 %v206, 0.5
    %v215 = vmul.f32 %v211, 0.5
    %v216 = vmul.f32 %v206, 0.70710677
    %v217 = vmul.f32 %v211, 0.70710677
    %v218 = verf.f32.pop %v216
    %v219 = verf.f32.pop %v217
    %v220 = vadd.f32 %v218, 1.0
    %v221 = vadd.f32 %v219, 1.0
    %v222 = vmul.f32 %v214, %v220
    %v223 = vmul.f32 %v215, %v221
    %v224 = vld [vmem:[#allocation7] sm:$0xff]
    %v225 = vld [vmem:[#allocation7 + $0x8] sm:$0xff]
    %v226 = vld [vmem:[#allocation7 + $0x10] sm:$0xff]
    %v227 = vld [vmem:[#allocation7 + $0x18] sm:$0xff]
    %v228 = vld [vmem:[#allocation7 + $0x20] sm:$0xff]
    %v229 = vld [vmem:[#allocation7 + $0x28] sm:$0xff]
    %v230 = vld [vmem:[#allocation7 + $0x30] sm:$0xff]
    %v231 = vld [vmem:[#allocation7 + $0x38] sm:$0xff]
    %v232 = vld [vmem:[%s6] sm:$0x1]
    %v234 = vlaneseq
    %v235 = vshrl.u32 %v234, 7
    %v236 = vsub.s32 0, %v235
    %v237 = vrot.slane %v232, %v236
    %vm239 = vcmask 523264
    %v241 = vsel %vm239, %v222, 0
    %v244 = vsel %vm239, %v223, 0
    %246 = vmatprep.subr.mxu0 0.0
    %247 = vmatpush1.msra.mxu0 %v224
    %248 = vmatprep.subr.mxu0 0.0
    %249 = vmatpush1.msra.mxu0 %v225
    %250 = vmatprep.subr.mxu0 0.0
    %251 = vmatpush1.msra.mxu0 %v226
    %252 = vmatprep.subr.mxu0 0.0
    %253 = vmatpush1.msra.mxu0 %v227
    %254 = vmatprep.subr.mxu0 0.0
    %255 = vmatpush1.msra.mxu0 %v228
    %256 = vmatprep.subr.mxu0 0.0
    %257 = vmatpush1.msra.mxu0 %v229
    %258 = vmatprep.subr.mxu0 0.0
    %259 = vmatpush1.msra.mxu0 %v230
    %260 = vmatprep.subr.mxu0 0.0
    %261 = vmatpush1.msra.mxu0 %v231
    %262 = vmatprep.subr.mxu0 0.0
    %263 = vmatpush1.msra.mxu0 0.0
    %264 = vmatprep.subr.mxu0 0.0
    %265 = vmatpush1.msra.mxu0 0.0
    %266 = vmatprep.subr.mxu0 0.0
    %267 = vmatpush1.msra.mxu0 0.0
    %268 = vmatprep.subr.mxu0 0.0
    %269 = vmatpush1.msra.mxu0 0.0
    %270 = vmatprep.subr.mxu0 0.0
    %271 = vmatpush1.msra.mxu0 0.0
    %272 = vmatprep.subr.mxu0 0.0
    %273 = vmatpush1.msra.mxu0 0.0
    %274 = vmatprep.subr.mxu0 0.0
    %275 = vmatpush1.msra.mxu0 0.0
    %276 = vmatprep.subr.mxu0 0.0
    %277 = vmatpush1.msra.mxu0 0.0
    %278 = vmatprep.subr.mxu0 0.0
    %279 = vmatpush1.msra.mxu0 0.0
    %280 = vmatprep.subr.mxu0 0.0
    %281 = vmatpush1.msra.mxu0 0.0
    %282 = vmatprep.subr.mxu0 0.0
    %283 = vmatpush1.msra.mxu0 0.0
    %284 = vmatprep.subr.mxu0 0.0
    %285 = vmatpush1.msra.mxu0 0.0
    %286 = vmatprep.subr.mxu0 0.0
    %287 = vmatpush1.msra.mxu0 0.0
    %288 = vmatprep.subr.mxu0 0.0
    %289 = vmatpush1.msra.mxu0 0.0
    %290 = vmatprep.subr.mxu0 0.0
    %291 = vmatpush1.msra.mxu0 0.0
    %292 = vmatprep.subr.mxu0 0.0
    %293 = vmatpush1.msra.mxu0 0.0
    %294 = vmatprep.subr.mxu0 0.0
    %295 = vmatpush1.msra.mxu0 0.0
    %296 = vmatprep.subr.mxu0 0.0
    %297 = vmatpush1.msra.mxu0 0.0
    %298 = vmatprep.subr.mxu0 0.0
    %299 = vmatpush1.msra.mxu0 0.0
    %300 = vmatprep.subr.mxu0 0.0
    %301 = vmatpush1.msra.mxu0 0.0
    %302 = vmatprep.subr.mxu0 0.0
    %303 = vmatpush1.msra.mxu0 0.0
    %304 = vmatprep.subr.mxu0 0.0
    %305 = vmatpush1.msra.mxu0 0.0
    %306 = vmatprep.subr.mxu0 0.0
    %307 = vmatpush1.msra.mxu0 0.0
    %308 = vmatprep.subr.mxu0 0.0
    %309 = vmatpush1.msra.mxu0 0.0
    %310 = vmatprep.mubr.f32.mxu0 0.0
    %311 = vmatmul.mubr.f32.gmra.mrb[0].mxu0 %v241
    %v312 = vpop.f32.mrb[0].mxu0
    %v313 = vadd.f32 %v237, %v312
    %v314 = vpop.f32.mrb[0].mxu0
    %315 = vmatprep.mubr.f32.mxu0 0.0
    %316 = vmatmul.mubr.f32.gmra.mrb[0].mxu0 %v244
    %v317 = vpop.f32.mrb[0].mxu0
    %v318 = vadd.f32 %v237, %v317
    %v319 = vpop.f32.mrb[0].mxu0
    %320 = vdwg.mxu0
    %v321 = vsel %vm239, %v313, 0.0
    %322 = vadd.xlane.f32.xlu0 %v321
    %v323 = vpop.xlane.xlu0 %322
    %v324 = vsel %vm239, %v318, 0.0
    %325 = vadd.xlane.f32.xlu0 %v324
    %v326 = vpop.xlane.xlu0 %325
    %v327 = vrcp.pop 64.0
    %v328 = vmul.f32 %v323, %v327
    %v329 = vmul.f32 %v326, %v327
    %v330 = vsub.f32 %v313, %v328
    %v331 = vsub.f32 %v318, %v329
    %v332 = vmul.f32 %v330, %v330
    %v333 = vmul.f32 %v331, %v331
    %v334 = vsel %vm239, %v332, 0.0
    %335 = vadd.xlane.f32.xlu0 %v334
    %v336 = vpop.xlane.xlu0 %335
    %v337 = vsel %vm239, %v333, 0.0
    %338 = vadd.xlane.f32.xlu0 %v337
    %v339 = vpop.xlane.xlu0 %338
    %v340 = vmul.f32 %v336, %v327
    %v341 = vmul.f32 %v339, %v327
    %v342 = vadd.f32 %v340, 1e-05
    %v343 = vadd.f32 %v341, 1e-05
    %v344 = vrsqrt.pop %v342
    %v345 = vrsqrt.pop %v343
    %v346 = vmul.f32 %v330, %v344
    %v347 = vmul.f32 %v331, %v345
    %v348 = vld [vmem:[%s7] sm:$0x1]
    %v350 = vlaneseq
    %v351 = vshrl.u32 %v350, 7
    %v352 = vsub.s32 0, %v351
    %v353 = vrot.slane %v348, %v352
    %v355 = vmul.f32 %v346, %v353
    %v356 = vmul.f32 %v347, %v353
    %v357 = vld [vmem:[%s8] sm:$0x1]
    %v359 = vlaneseq
    %v360 = vshrl.u32 %v359, 7
    %v361 = vsub.s32 0, %v360
    %v362 = vrot.slane %v357, %v361
    %v364 = vadd.f32 %v355, %v362
    %v365 = vadd.f32 %v356, %v362
    %366 = vst.msk [vmem:[#allocation8] sm:$0xff] %vm239, %v364
    %367 = vst.msk [vmem:[#allocation8 + $0x8] sm:$0xff] %vm239, %v365
    // Predicated region
    $region50: #{tpu_custom_call.1} parent=1 // pred_check
      _
    $region51: #{tpu_custom_call.1} parent=1 // pred_check_branch
      %369 = sbr.rel (0) target = $region53
    $region52: #{tpu_custom_call.1} parent=1 // pred_region
      %s371 = ssub.s32 256, 256
      %372 = vsyncadd [#allocation4], %s371
      %s373 = sshll.u32 [#allocation8], 4
      %s374 = int_to_ptr.vmem [resolvable:$true] %s373
      %379 = dma.vmem_to_hbm [thread:$0]  %s374, 256, %s9, [#allocation4], 128, 128, 8
    $region53: #{tpu_custom_call.1} parent=1 // pred_fallthru
      _
    // Predicated region
    $region54: #{tpu_custom_call.1} parent=1 // pred_check
      _
    $region55: #{tpu_custom_call.1} parent=1 // pred_check_branch
      %381 = sbr.rel (0) target = $region57
    $region56: #{tpu_custom_call.1} parent=1 // pred_region
      %382 = dma.done [#allocation4], 256
    $region57: #{tpu_custom_call.1} parent=1 // pred_fallthru
      _
    %383 = vsyncpa [#allocation3], 1
    %384 = vsyncpa [#allocation6], 1
    %385 = vsyncpa [#allocation4], 1

</llo_original>
